<compile_context>
chip_gen: v5e
topology: v5e:2x2
jax: 0.10.0
libtpu: 0.0.40
codegen_flags: <defaults>
</compile_context>

<pallas_src>
import functools

import numpy as np
import jax
import jax.numpy as jnp
from jax import lax
from jax.experimental import pallas as pl
from jax.experimental.pallas import tpu as pltpu


# ----------------------------------------------------------------------------
# Parameter construction (mirrors EccPool.__init__, deterministic, no files)
# ----------------------------------------------------------------------------
def _disk_mask(out_shape, center, radius):
    """Pixels strictly inside the disk (skimage.draw.disk uses distances < 1)."""
    rr, cc = np.ogrid[:out_shape, :out_shape]
    d = ((rr - center) / float(radius)) ** 2 + ((cc - center) / float(radius)) ** 2
    return d < 1.0


def build_ecc_pool_params(input_shape, rf_min=2, ecc_slope=0.2, deg2px=15,
                          fovea_size=4, rf_quant=1, stride=2):
    """Returns (out_shape, rf_sizes, pads, masks[R, out, out]).

    Masks are NOT broadcast over channels (the PyTorch module materializes a
    (C, out, out) copy per ring; that broadcast is implicit in-kernel)."""
    base = input_shape[2]
    out_shape = int((base + 1) / stride)
    c = int(out_shape / 2)

    rf_sizes, pads, masks = [], [], []

    def add_ring(rf, mask2d):
        rf = int(rf)
        rf_sizes.append(rf)
        pads.append((rf - 1) // stride)
        masks.append(mask2d.astype(np.float32))

    # NOTE: pool_type ('max') is unused by the original module's forward
    # (all pools are AvgPool2d), so it is ignored here too.
    ecc = round(fovea_size * deg2px / 2)
    if ecc > out_shape / 2:
        add_ring(rf_min, np.ones((out_shape, out_shape), np.float32))
    else:
        m = np.zeros((out_shape, out_shape), np.float32)
        m[_disk_mask(out_shape, c, ecc)] = 1.0
        add_ring(rf_min, m)
        ecc += round(rf_quant * deg2px / 2)
        while ecc < out_shape / 2:
            m = np.zeros((out_shape, out_shape), np.float32)
            m[_disk_mask(out_shape, c, ecc)] = 1.0
            m[_disk_mask(out_shape, c, ecc - round(rf_quant * deg2px / 2))] = 0.0
            rf = rf_min + round(ecc_slope * (ecc * 2 - fovea_size * deg2px))
            add_ring(rf, m)
            ecc += round(rf_quant * deg2px / 2)
        m = np.ones((out_shape, out_shape), np.float32)
        m[_disk_mask(out_shape, c, ecc - round(rf_quant * deg2px / 2))] = 0.0
        rf = rf_min + round(ecc_slope * (ecc * 2 - fovea_size * deg2px))
        add_ring(rf, m)

    return out_shape, rf_sizes, pads, np.stack(masks, axis=0)


def build_pool_matrices(H, W, out_shape, rf_sizes, pads, stride,
                        lane=128, sublane=8):
    """Per-ring separable average-pooling matrices over the UNPADDED axes.

    count_include_pad=True semantics: weight is always 1/rf; window positions
    outside [0, n) are dropped (they would multiply zeros).

    Alignment choices (perf feedback):
      * H is padded up to a multiple of 8 (Hp) so the in-kernel flatten of the
        (nb, ct, Hp, W) block into (nb*ct*Hp, W) is a zero-cost view.
      * each ring's column group in MT is padded to a multiple of 128 (out_pad)
        so per-ring lane slices of the stage-1 result are free aligned views.

    Returns:
      M  : (R, out, Hp)      -- row-pool matrices (stage 2), zero beyond H
      MT : (W, R*out_pad)    -- column-pool matrices, ring-stacked, transposed,
                                lane-padded per ring, for the flat stage-1 dot.
    """
    R = len(rf_sizes)
    Hp = -(-H // sublane) * sublane
    out_pad = -(-out_shape // lane) * lane

    def axis_matrix(n, rf, p):
        # AvgPool2d output size must equal out_shape for the module to work.
        assert (n + 2 * p - rf) // stride + 1 == out_shape
        A = np.zeros((out_shape, n), np.float32)
        for i in range(out_shape):
            s = i * stride - p
            lo, hi = max(s, 0), min(s + rf, n)
            A[i, lo:hi] = 1.0 / rf
        return A

    M = np.zeros((R, out_shape, Hp), np.float32)
    MT = np.zeros((W, R * out_pad), np.float32)
    for r, (rf, p) in enumerate(zip(rf_sizes, pads)):
        M[r, :, :H] = axis_matrix(H, rf, p)
        MT[:, r * out_pad:r * out_pad + out_shape] = axis_matrix(W, rf, p).T
    return M, MT


# ----------------------------------------------------------------------------
# Pallas kernel
# ----------------------------------------------------------------------------
def _ecc_pool_kernel(x_ref, mt_ref, m_ref, mask_ref, o_ref, *, use_bf16):
    nb, ct, Hp, W = x_ref.shape
    R, out, _ = m_ref.shape
    out_pad = mask_ref.shape[-1]
    bc = nb * ct
    cdt = jnp.bfloat16 if use_bf16 else jnp.float32

    # Stage 1: pool along W for all batch elems, channels, rows and rings in a
    # single 2-D MXU matmul.  The flatten merges leading dims only and Hp is a
    # multiple of 8 (wrapper guarantee), so it is a free view — no relayout.
    xf = x_ref[...].reshape(bc * Hp, W)
    if use_bf16:
        xf = xf.astype(cdt)
    p = jnp.dot(xf, mt_ref[...].astype(cdt),
                preferred_element_type=jnp.float32)            # (bc*Hp, R*out_pad)
    p3 = p.reshape(bc, Hp, R * out_pad)                        # free leading split
    if use_bf16:
        p3 = p3.astype(cdt)

    # Stage 2 + masked accumulation, unrolled over the (few, <= ~8) rings:
    # per-ring lane slices are 128-aligned free views; M_r / masks stay
    # VMEM-resident (constant index maps).  acc starts from ring 0's result.
    acc = None
    for r in range(R):
        pr = p3[:, :, r * out_pad:(r + 1) * out_pad]           # (bc, Hp, out_pad)
        mr = jnp.broadcast_to(m_ref[r].astype(cdt)[None], (bc, out, Hp))
        pooled = lax.dot_general(                              # 'bih,bhj->bij'
            mr, pr, (((2,), (1,)), ((0,), (0,))),
            preferred_element_type=jnp.float32)                # (bc, out, out_pad)
        contrib = mask_ref[r][None] * pooled
        acc = contrib if acc is None else acc + contrib

    # Single full-block store (no per-channel RMW); drop the lane padding.
    o_ref[...] = acc[:, :, :out].reshape(nb, ct, out, out)


# ----------------------------------------------------------------------------
# Block selection: generation-aware VMEM budget + intermediate accounting
# ----------------------------------------------------------------------------
def _divisors(n):
    return [d for d in range(1, n + 1) if n % d == 0]


def _vmem_budget():
    """(block-selection budget, vmem_limit_bytes) derived from the chip.

    ~3/4 of physical VMEM for block selection (96 MiB on v5e/v6e, 48 MiB on
    v7x), 7/8 as the scoped compiler limit.  Falls back to a 64 MiB capacity
    (safe on every generation) if the query is unavailable."""
    try:
        cap = int(pltpu.get_tpu_info().vmem_capacity_bytes)
    except Exception:
        cap = 64 << 20
    return (cap * 3) // 4, (cap * 7) // 8


def _choose_blocks(N, C, Hp, W, out, out_pad, R, budget_bytes):
    """Largest (batch_block, channel_block) divisor pair that fits the VMEM
    budget, counting double-buffered I/O blocks, the resident ring matrices
    AND the in-kernel intermediates.  Guarantees >= 2 parallel grid steps
    whenever N*C >= 2 so both v7x TensorCores get work."""
    const_bytes = 4 * (W * R * out_pad + R * out * Hp + R * out * out_pad)

    def fits(nb, ct):
        bc = nb * ct
        io_step = 4 * bc * (Hp * W + out * out)        # x block + out block
        inter = 4 * bc * (Hp * R * out_pad             # stage-1 result p
                          + out * Hp                   # one ring's broadcast M_r
                          + 2 * out * out_pad)         # pooled + acc
        return 2 * io_step + inter + const_bytes <= budget_bytes

    # When N == 1 the channel axis must provide the >=2 parallel steps.
    c_cap = C if N > 1 else max(1, C // 2)
    ct = max([d for d in _divisors(C) if d <= c_cap and fits(1, d)] or [1])
    if N > 1:
        nb = max([d for d in _divisors(N) if d <= N // 2 and fits(d, ct)] or [1])
    else:
        nb = 1
    return nb, ct


# ----------------------------------------------------------------------------
# Wrapper
# ----------------------------------------------------------------------------
def ecc_pool_forward(x, M, MT, masks, *, block_n=None, block_c=None,
                     use_bf16=False, x_buffer_count=None,
                     vmem_limit_bytes=None):
    """x: (N, C, H, W); M: (R, out, Hp); MT: (W, R*out_pad); masks: (R, out, out).

    use_bf16: feed the MXU bf16 operands (f32 accumulation) — ~3-4x MXU
              throughput in the compute-bound regime, looser numerics.
    x_buffer_count: optional deeper input pipelining (pl.Buffered) for
              memory-bound (small-out) configs; default keeps double buffering.
    """
    x = x.astype(jnp.float32)
    N, C, H, W = x.shape
    assert H == W, "EccPool assumes square spatial input"
    R, out, Hp = M.shape
    out_pad = MT.shape[1] // R
    assert MT.shape == (W, R * out_pad)
    assert Hp % 8 == 0 and Hp >= H

    # Guarantee the in-kernel flatten is a free view (rare path; no-op when
    # H is already a multiple of 8, e.g. 16 or 224).
    if Hp != H:
        x = jnp.pad(x, ((0, 0), (0, 0), (0, Hp - H), (0, 0)))

    # Lane-pad the masks to match the padded pooled columns.
    masks_p = np.zeros((R, out, out_pad), np.float32)
    masks_p[:, :, :out] = np.asarray(masks, np.float32)

    budget, default_limit = _vmem_budget()
    if vmem_limit_bytes is None:
        vmem_limit_bytes = default_limit
    if block_n is None or block_c is None:
        bn, bct = _choose_blocks(N, C, Hp, W, out, out_pad, R, budget)
        block_n = block_n or bn
        block_c = block_c or bct
    assert N % block_n == 0 and C % block_c == 0

    x_spec_kwargs = {}
    if x_buffer_count is not None and x_buffer_count != 2:
        x_spec_kwargs["pipeline_mode"] = pl.Buffered(x_buffer_count)

    kernel = functools.partial(_ecc_pool_kernel, use_bf16=use_bf16)
    return pl.pallas_call(
        kernel,
        out_shape=jax.ShapeDtypeStruct((N, C, out, out), jnp.float32),
        grid_spec=pltpu.PrefetchScalarGridSpec(
            num_scalar_prefetch=0,
            grid=(N // block_n, C // block_c),
            in_specs=[
                pl.BlockSpec((block_n, block_c, Hp, W),
                             lambda n, c: (n, c, 0, 0), **x_spec_kwargs),
                # constant index maps -> fetched once, VMEM-resident
                pl.BlockSpec((W, R * out_pad), lambda n, c: (0, 0)),
                pl.BlockSpec((R, out, Hp), lambda n, c: (0, 0, 0)),
                pl.BlockSpec((R, out, out_pad), lambda n, c: (0, 0, 0)),
            ],
            out_specs=pl.BlockSpec((block_n, block_c, out, out),
                                   lambda n, c: (n, c, 0, 0)),
        ),
        compiler_params=pltpu.CompilerParams(
            dimension_semantics=("parallel", "parallel"),
            vmem_limit_bytes=int(vmem_limit_bytes)),
    )(x, jnp.asarray(MT), jnp.asarray(M), jnp.asarray(masks_p))


# ----------------------------------------------------------------------------
# Pure-JAX reference (AvgPool2d via reduce_window) for correctness check
# ----------------------------------------------------------------------------
def ecc_pool_reference(x, rf_sizes, pads, masks, stride, out_shape):
    N, C, H, W = x.shape
    out = jnp.zeros((N, C, out_shape, out_shape), jnp.float32)
    for r, (rf, p) in enumerate(zip(rf_sizes, pads)):
        summed = lax.reduce_window(x.astype(jnp.float32), 0.0, lax.add,
                                   (1, 1, rf, rf), (1, 1, stride, stride),
                                   [(0, 0), (0, 0), (p, p), (p, p)])
        pooled = summed / float(rf * rf)           # count_include_pad=True
        out = out + jnp.asarray(masks[r])[None, None] * pooled
    return out


if __name__ == "__main__":
    key = jax.random.PRNGKey(0)
    N, C, H = 2, 4, 16
    x = jax.random.normal(key, (N, C, H, H), dtype=jnp.float32)

    configs = [
        # default hyperparams: fovea covers whole (small) output -> single ring, ones mask
        dict(rf_min=2, ecc_slope=0.2, deg2px=15, fovea_size=4, rf_quant=1, stride=2),
        # scaled-down eccentricity params: exercises the multi-ring (disk mask) path
        dict(rf_min=2, ecc_slope=0.2, deg2px=2, fovea_size=2, rf_quant=1, stride=2),
    ]

    for cfg in configs:
        out_shape, rf_sizes, pads, masks = build_ecc_pool_params((C, H, H), **cfg)
        M, MT = build_pool_matrices(H, H, out_shape, rf_sizes, pads, cfg["stride"])

        y_ref = ecc_pool_reference(x, rf_sizes, pads, masks, cfg["stride"], out_shape)

        # f32 path: exact (to fp tolerance) match against AvgPool2d semantics.
        y = jax.block_until_ready(ecc_pool_forward(x, M, MT, masks))
        np.testing.assert_allclose(np.asarray(y), np.asarray(y_ref),
                                   rtol=1e-5, atol=1e-5)

        # bf16 MXU-feeding path: runs the same kernel with bf16 operands
        # (f32 accumulation); looser tolerance by construction.
        y16 = jax.block_until_ready(ecc_pool_forward(x, M, MT, masks, use_bf16=True))
        np.testing.assert_allclose(np.asarray(y16), np.asarray(y_ref),
                                   rtol=8e-2, atol=8e-2)

    print("KERNEL_OK")
</pallas_src>

<mosaic_0001>
module attributes {stable_mosaic.version = 11 : i64} {
  func.func @_ecc_pool_kernel(%arg0: i32, %arg1: i32, %arg2: memref<1x4x16x16xf32, #tpu.memory_space<vmem>>, %arg3: memref<16x128xf32, #tpu.memory_space<vmem>>, %arg4: memref<1x8x16xf32, #tpu.memory_space<vmem>>, %arg5: memref<1x8x128xf32, #tpu.memory_space<vmem>>, %arg6: memref<1x4x8x8xf32, #tpu.memory_space<vmem>>) attributes {dimension_semantics = [#tpu.dimension_semantics<parallel>, #tpu.dimension_semantics<parallel>], iteration_bounds = array<i64: 2, 1>, scalar_prefetch = 0 : i64, scratch_operands = 0 : i64, tpu.core_type = #tpu.core_type<tc>, window_params = [{transform_indices = @transform_0, window_bounds = array<i64: 1, 4, 16, 16>}, {pipeline_mode = #tpu.pipeline_mode<synchronous>, transform_indices = @transform_1, window_bounds = array<i64: 16, 128>}, {pipeline_mode = #tpu.pipeline_mode<synchronous>, transform_indices = @transform_2, window_bounds = array<i64: 1, 8, 16>}, {pipeline_mode = #tpu.pipeline_mode<synchronous>, transform_indices = @transform_3, window_bounds = array<i64: 1, 8, 128>}, {transform_indices = @transform_4, window_bounds = array<i64: 1, 4, 8, 8>}]} {
    %c0 = arith.constant 0 : index
    %c0_0 = arith.constant 0 : index
    %c0_1 = arith.constant 0 : index
    %c0_2 = arith.constant 0 : index
    %0 = vector.load %arg2[%c0, %c0_0, %c0_1, %c0_2] : memref<1x4x16x16xf32, #tpu.memory_space<vmem>>, vector<1x4x16x16xf32>
    %1 = vector.shape_cast %0 : vector<1x4x16x16xf32> to vector<64x16xf32>
    %c0_3 = arith.constant 0 : index
    %c0_4 = arith.constant 0 : index
    %2 = vector.load %arg3[%c0_3, %c0_4] : memref<16x128xf32, #tpu.memory_space<vmem>>, vector<16x128xf32>
    %cst = arith.constant dense<0.000000e+00> : vector<64x128xf32>
    %3 = tpu.matmul %1, %2, %cst {dimension_numbers = #tpu.dot_dimension_numbers<[1], [0], [0], [1], [0, 0, 1, 1], [], []>} : vector<64x16xf32>, vector<16x128xf32>, vector<64x128xf32> -> vector<64x128xf32>
    %4 = vector.shape_cast %3 : vector<64x128xf32> to vector<4x16x128xf32>
    %c0_5 = arith.constant 0 : index
    %c0_6 = arith.constant 0 : index
    %c0_7 = arith.constant 0 : index
    %5 = vector.load %arg4[%c0_5, %c0_6, %c0_7] : memref<1x8x16xf32, #tpu.memory_space<vmem>>, vector<1x8x16xf32>
    %6 = vector.shape_cast %5 : vector<1x8x16xf32> to vector<8x16xf32>
    %7 = vector.shape_cast %6 : vector<8x16xf32> to vector<1x8x16xf32>
    %8 = vector.shape_cast %7 : vector<1x8x16xf32> to vector<1x8x16xf32>
    %9 = vector.broadcast %8 : vector<1x8x16xf32> to vector<4x8x16xf32>
    %cst_8 = arith.constant dense<0.000000e+00> : vector<4x8x128xf32>
    %10 = tpu.matmul %9, %4, %cst_8 {dimension_numbers = #tpu.dot_dimension_numbers<[2], [1], [1], [2], [0, 0, 0, 1, 1, 2], [0], [0]>} : vector<4x8x16xf32>, vector<4x16x128xf32>, vector<4x8x128xf32> -> vector<4x8x128xf32>
    %c0_9 = arith.constant 0 : index
    %c0_10 = arith.constant 0 : index
    %c0_11 = arith.constant 0 : index
    %11 = vector.load %arg5[%c0_9, %c0_10, %c0_11] : memref<1x8x128xf32, #tpu.memory_space<vmem>>, vector<1x8x128xf32>
    %12 = vector.shape_cast %11 : vector<1x8x128xf32> to vector<8x128xf32>
    %13 = vector.shape_cast %12 : vector<8x128xf32> to vector<1x8x128xf32>
    %14 = vector.broadcast %13 : vector<1x8x128xf32> to vector<4x8x128xf32>
    %15 = arith.mulf %14, %10 : vector<4x8x128xf32>
    %16 = vector.extract_strided_slice %15 {offsets = [0, 0, 0], sizes = [4, 8, 8], strides = [1, 1, 1]} : vector<4x8x128xf32> to vector<4x8x8xf32>
    %17 = vector.shape_cast %16 : vector<4x8x8xf32> to vector<1x4x8x8xf32>
    %c0_12 = arith.constant 0 : index
    %c0_13 = arith.constant 0 : index
    %c0_14 = arith.constant 0 : index
    %c0_15 = arith.constant 0 : index
    %18 = vector.load %arg6[%c0_12, %c0_13, %c0_14, %c0_15] : memref<1x4x8x8xf32, #tpu.memory_space<vmem>>, vector<1x4x8x8xf32>
    tpu.vector_store %arg6[%c0_12, %c0_13, %c0_14, %c0_15], %17 {strides = array<i32>} : memref<1x4x8x8xf32, #tpu.memory_space<vmem>>, vector<1x4x8x8xf32>,
    return
  }
  func.func @transform_0(%arg0: i32, %arg1: i32) -> (i32, i32, i32, i32) {
    %c0_i32 = arith.constant 0 : i32
    %c0_i32_0 = arith.constant 0 : i32
    %c0_i32_1 = arith.constant 0 : i32
    return %arg0, %arg1, %c0_i32, %c0_i32_0 : i32, i32, i32, i32
  }
  func.func @transform_1(%arg0: i32, %arg1: i32) -> (i32, i32) {
    %c0_i32 = arith.constant 0 : i32
    %c0_i32_0 = arith.constant 0 : i32
    %c0_i32_1 = arith.constant 0 : i32
    return %c0_i32, %c0_i32_0 : i32, i32
  }
  func.func @transform_2(%arg0: i32, %arg1: i32) -> (i32, i32, i32) {
    %c0_i32 = arith.constant 0 : i32
    %c0_i32_0 = arith.constant 0 : i32
    %c0_i32_1 = arith.constant 0 : i32
    %c0_i32_2 = arith.constant 0 : i32
    return %c0_i32, %c0_i32_0, %c0_i32_1 : i32, i32, i32
  }
  func.func @transform_3(%arg0: i32, %arg1: i32) -> (i32, i32, i32) {
    %c0_i32 = arith.constant 0 : i32
    %c0_i32_0 = arith.constant 0 : i32
    %c0_i32_1 = arith.constant 0 : i32
    %c0_i32_2 = arith.constant 0 : i32
    return %c0_i32, %c0_i32_0, %c0_i32_1 : i32, i32, i32
  }
  func.func @transform_4(%arg0: i32, %arg1: i32) -> (i32, i32, i32, i32) {
    %c0_i32 = arith.constant 0 : i32
    %c0_i32_0 = arith.constant 0 : i32
    %c0_i32_1 = arith.constant 0 : i32
    return %arg0, %arg1, %c0_i32, %c0_i32_0 : i32, i32, i32, i32
  }
}

</mosaic_0001>

<llo_original>
// kernel: tpu_custom_call.1
$region0: #{tpu_custom_call.1}
  #allocation0 [shape = 'u32[]', space=smem, size = 0x4, offset = 0x4, fixed_abs, tag = 'smem constant byte address 0x4 - core index']
  #allocation1 [shape = 'u32[72,128]{1,0:T(1,128)}', space=vmem, size = 0x9000, scoped, tag = 'internal scratch']
  %s0 = inlined_call_operand.hbm [shape: f32[2,4,16,16], index: 0, kind: input, shape index: {}]
  %s1 = inlined_call_operand.hbm [shape: f32[16,128], index: 1, kind: input, shape index: {}]
  %s2 = inlined_call_operand.hbm [shape: f32[1,8,16], index: 2, kind: input, shape index: {}]
  %s3 = inlined_call_operand.hbm [shape: f32[1,8,128], index: 3, kind: input, shape index: {}]
  %s4 = inlined_call_operand.hbm [shape: f32[2,4,8,8], index: 4, kind: output, shape index: {}]
  %s5 = sld [smem:[#allocation0]]
  $region65: #{tpu_custom_call.1} parent=0
    _
  %s7 = ssub.s32 1, %s5
  %s8 = scalar_select 0, %s7, %s5
  $region1: #{tpu_custom_call.1} parent=0
    #allocation2 [shape = 'u8[65536]{0}', space=vmem, size = 0x10000, scoped, tag = 'input window, operand 0']
    #allocation3 [shape = 's32[2]{0}', space=sflag, size = 0x8, scoped, tag = 'scoped memory for tpu_custom_call.1']
    #allocation4 [shape = 's32[2]{0}', space=sflag, size = 0x8, scoped, tag = 'scoped memory for tpu_custom_call.1']
    #allocation5 [shape = 'u8[8192]{0}', space=vmem, size = 0x2000, scoped, tag = 'input window, operand 1, single buffered']
    #allocation6 [shape = 's32[1]{0}', space=sflag, size = 0x4, scoped, tag = 'scoped memory for tpu_custom_call.1']
    #allocation7 [shape = 'u8[4096]{0}', space=vmem, size = 0x1000, scoped, tag = 'input window, operand 2, single buffered']
    #allocation8 [shape = 'u8[4096]{0}', space=vmem, size = 0x1000, scoped, tag = 'input window, operand 3, single buffered']
    #allocation9 [shape = 's32[1]{0}', space=sflag, size = 0x4, scoped, tag = 'scoped memory for tpu_custom_call.1']
    #allocation10 [shape = 'u8[32768]{0}', space=vmem, size = 0x8000, scoped, tag = 'output window, operand 0']
    %9 = vsyncpa [#allocation3], 0
    %s10 = scalar_lea.sflag [#allocation3], 1
    %11 = vsyncpa %s10, 0
    %12 = vsyncpa [#allocation6], 0
    %13 = vsyncpa [#allocation9], 0
    %14 = vsyncpa [#allocation4], 0
    %s15 = scalar_lea.sflag [#allocation4], 1
    %16 = vsyncpa %s15, 0
    loop: start=0, step=1, limit=4
    $region2: #{tpu_custom_call.1} parent=1 // loop_pre_header
      _
    $region3: #{tpu_custom_call.1} parent=1 // loop_header
      %s18 = sphi 0, %s22
      %p19 = scmp.ge.s32.totalorder %s18, 4
      %s25 = sphi 0, %s37
      %s26 = sphi 0, %s33
      %s27 = sphi 0, %s25
      %s28 = sphi 0, %s26
      %s29 = sphi 0, %s27
      %s30 = sphi 0, %s28
      %s42 = sphi 0, %s44
      %s45 = sphi 0, %s42
      %s46 = sphi 0, %s45
      %s62 = sphi 0, %s46
      %s66 = sphi 0, %s66
      %s68 = sphi 0, %s66
      %s69 = sphi 0, %s68
      %s83 = sphi 0, %s69
      %s87 = sphi 0, %s87
      %s89 = sphi 0, %s87
      %s90 = sphi 0, %s89
      %s104 = sphi 0, %s90
      %s108 = sphi 0, %s108
      %s110 = sphi 0, %s108
      %s111 = sphi 0, %s110
      %s125 = sphi 0, %s111
      %s133 = sphi 0, %s135
      %s136 = sphi 0, %s133
      %s137 = sphi 0, %s136
      %s153 = sphi 0, %s137
    $region4: #{tpu_custom_call.1} parent=1 // loop_header_branch
      %21 = sbr.rel (%p19) target = $region8
    $region5: #{tpu_custom_call.1} parent=1 // loop_body
      %s23 = ssub.s32 %s18, 1
      %s24 = ssub.s32 %s18, 2
      %s31 = sadd.s32 1, %s26
      %p32 = scmp.ge.s32.totalorder %s31, 1
      %s33 = scalar_select %p32, 0, %s31
      %s34 = sadd.s32 1, %s25
      %s35 = scalar_select %p32, %s34, %s25
      %p36 = scmp.ge.s32.totalorder %s35, 2
      %s37 = scalar_select %p36, 0, %s35
      %s38 = ssub.s32 %s25, %s37
      %s39 = ssub.s32 %s26, %s33
      %s40 = sor.u32 %s38, %s39
      %p41 = scmp.eq.s32.totalorder %s40, 0
      %s43 = sadd.s32 %s42, 1
      %s44 = scalar_select %p41, %s42, %s43
      %p47 = pneg %p41
      %p48 = scmp.eq.s32.totalorder %s18, 1
      %p49 = por %p47, %p48
      %p50 = scmp.ne.s32.totalorder %s42, %s45
      %p51 = scmp.eq.s32.totalorder %s18, 0
      %p52 = por %p50, %p51
      %p53 = scmp.ne.s32.totalorder %s42, %s45
      %p54 = scmp.eq.s32.totalorder %s23, 1
      %p55 = por %p53, %p54
      %p56 = scmp.ne.s32.totalorder %s45, %s46
      %p57 = scmp.eq.s32.totalorder %s23, 0
      %p58 = por %p56, %p57
      %p59 = scmp.ne.s32.totalorder %s45, %s46
      %p60 = scmp.eq.s32.totalorder %s24, 1
      %p61 = por %p59, %p60
      %p63 = scmp.ne.s32.totalorder %s46, %s62
      %p64 = scmp.eq.s32.totalorder %s24, 0
      %p65 = por %p63, %p64
      %s67 = sadd.s32 %s66, 1
      %p70 = scmp.eq.s32.totalorder %s18, 1
      %p71 = scmp.ne.s32.totalorder %s66, %s68
      %p72 = scmp.eq.s32.totalorder %s18, 0
      %p73 = por %p71, %p72
      %p74 = scmp.ne.s32.totalorder %s66, %s68
      %p75 = scmp.eq.s32.totalorder %s23, 1
      %p76 = por %p74, %p75
      %p77 = scmp.ne.s32.totalorder %s68, %s69
      %p78 = scmp.eq.s32.totalorder %s23, 0
      %p79 = por %p77, %p78
      %p80 = scmp.ne.s32.totalorder %s68, %s69
      %p81 = scmp.eq.s32.totalorder %s24, 1
      %p82 = por %p80, %p81
      %p84 = scmp.ne.s32.totalorder %s69, %s83
      %p85 = scmp.eq.s32.totalorder %s24, 0
      %p86 = por %p84, %p85
      %s88 = sadd.s32 %s87, 1
      %p91 = scmp.eq.s32.totalorder %s18, 1
      %p92 = scmp.ne.s32.totalorder %s87, %s89
      %p93 = scmp.eq.s32.totalorder %s18, 0
      %p94 = por %p92, %p93
      %p95 = scmp.ne.s32.totalorder %s87, %s89
      %p96 = scmp.eq.s32.totalorder %s23, 1
      %p97 = por %p95, %p96
      %p98 = scmp.ne.s32.totalorder %s89, %s90
      %p99 = scmp.eq.s32.totalorder %s23, 0
      %p100 = por %p98, %p99
      %p101 = scmp.ne.s32.totalorder %s89, %s90
      %p102 = scmp.eq.s32.totalorder %s24, 1
      %p103 = por %p101, %p102
      %p105 = scmp.ne.s32.totalorder %s90, %s104
      %p106 = scmp.eq.s32.totalorder %s24, 0
      %p107 = por %p105, %p106
      %s109 = sadd.s32 %s108, 1
      %p112 = scmp.eq.s32.totalorder %s18, 1
      %p113 = scmp.ne.s32.totalorder %s108, %s110
      %p114 = scmp.eq.s32.totalorder %s18, 0
      %p115 = por %p113, %p114
      %p116 = scmp.ne.s32.totalorder %s108, %s110
      %p117 = scmp.eq.s32.totalorder %s23, 1
      %p118 = por %p116, %p117
      %p119 = scmp.ne.s32.totalorder %s110, %s111
      %p120 = scmp.eq.s32.totalorder %s23, 0
      %p121 = por %p119, %p120
      %p122 = scmp.ne.s32.totalorder %s110, %s111
      %p123 = scmp.eq.s32.totalorder %s24, 1
      %p124 = por %p122, %p123
      %p126 = scmp.ne.s32.totalorder %s111, %s125
      %p127 = scmp.eq.s32.totalorder %s24, 0
      %p128 = por %p126, %p127
      %s129 = ssub.s32 %s25, %s37
      %s130 = ssub.s32 %s26, %s33
      %s131 = sor.u32 %s129, %s130
      %p132 = scmp.eq.s32.totalorder %s131, 0
      %s134 = sadd.s32 %s133, 1
      %s135 = scalar_select %p132, %s133, %s134
      %p138 = pneg %p132
      %p139 = scmp.eq.s32.totalorder %s18, 1
      %p140 = por %p138, %p139
      %p141 = scmp.ne.s32.totalorder %s133, %s136
      %p142 = scmp.eq.s32.totalorder %s18, 0
      %p143 = por %p141, %p142
      %p144 = scmp.ne.s32.totalorder %s133, %s136
      %p145 = scmp.eq.s32.totalorder %s23, 1
      %p146 = por %p144, %p145
      %p147 = scmp.ne.s32.totalorder %s136, %s137
      %p148 = scmp.eq.s32.totalorder %s23, 0
      %p149 = por %p147, %p148
      %p150 = scmp.ne.s32.totalorder %s136, %s137
      %p151 = scmp.eq.s32.totalorder %s24, 1
      %p152 = por %p150, %p151
      %p154 = scmp.ne.s32.totalorder %s137, %s153
      %p155 = scmp.eq.s32.totalorder %s24, 0
      %p156 = por %p154, %p155
      %p157 = scmp.le.s32.totalorder 1, %s18
      %p158 = scmp.lt.s32.totalorder %s18, 3
      %p159 = pnand %p157, %p158
      %p160 = pneg %p159
      // Predicated region
      $region9: #{tpu_custom_call.1} parent=5 // pred_check
        _
      $region10: #{tpu_custom_call.1} parent=5 // pred_check_branch
        %162 = sbr.rel (%p159) target = $region12
      $region11: #{tpu_custom_call.1} parent=5 // pred_region
        %s163 = ssub.s32 %s18, 1
        // Predicated region
        $region13: #{tpu_custom_call.1} parent=11 // pred_check
          %p164 = pneg %p79
        $region14: #{tpu_custom_call.1} parent=11 // pred_check_branch
          %166 = sbr.rel (%p164) target = $region16
        $region15: #{tpu_custom_call.1} parent=11 // pred_region
          %168 = vsyncadd [#allocation6], 0
          %s169 = sshll.u32 %s1, 4
          %s170 = int_to_ptr.hbm [resolvable:$true] %s169
          %s171 = sshll.u32 [#allocation5], 4
          %s172 = int_to_ptr.vmem [resolvable:$true] %s171
          %177 = dma.hbm_to_vmem [thread:$0]  %s170, 256, %s172, [#allocation6], 128, 128, 8
        $region16: #{tpu_custom_call.1} parent=11 // pred_fallthru
          _
        // Predicated region
        $region17: #{tpu_custom_call.1} parent=11 // pred_check
          %p178 = pneg %p100
        $region18: #{tpu_custom_call.1} parent=11 // pred_check_branch
          %180 = sbr.rel (%p178) target = $region20
        $region19: #{tpu_custom_call.1} parent=11 // pred_region
          %182 = vsyncadd [#allocation6], 0
          %s184 = sshll.u32 %s2, 4
          %s185 = int_to_ptr.hbm [resolvable:$true] %s184
          %s186 = sshll.u32 [#allocation7], 4
          %s187 = int_to_ptr.vmem [resolvable:$true] %s186
          %189 = dma.hbm_to_vmem [thread:$0]  %s185, 128, %s187, [#allocation6]
        $region20: #{tpu_custom_call.1} parent=11 // pred_fallthru
          _
        // Predicated region
        $region21: #{tpu_custom_call.1} parent=11 // pred_check
          %p190 = pneg %p121
        $region22: #{tpu_custom_call.1} parent=11 // pred_check_branch
          %192 = sbr.rel (%p190) target = $region24
        $region23: #{tpu_custom_call.1} parent=11 // pred_region
          %194 = vsyncadd [#allocation9], 0
          %s196 = sshll.u32 %s3, 4
          %s197 = int_to_ptr.hbm [resolvable:$true] %s196
          %s198 = sshll.u32 [#allocation8], 4
          %s199 = int_to_ptr.vmem [resolvable:$true] %s198
          %201 = dma.hbm_to_vmem [thread:$0]  %s197, 128, %s199, [#allocation9]
        $region24: #{tpu_custom_call.1} parent=11 // pred_fallthru
          _
      $region12: #{tpu_custom_call.1} parent=5 // pred_fallthru
        _
      %p202 = scmp.lt.s32.totalorder %s18, 2
      // Predicated region
      $region25: #{tpu_custom_call.1} parent=5 // pred_check
        %p203 = pneg %p202
      $region26: #{tpu_custom_call.1} parent=5 // pred_check_branch
        %205 = sbr.rel (%p203) target = $region28
      $region27: #{tpu_custom_call.1} parent=5 // pred_region
        // Predicated region
        $region29: #{tpu_custom_call.1} parent=27 // pred_check
          %p206 = pneg %p52
        $region30: #{tpu_custom_call.1} parent=27 // pred_check_branch
          %208 = sbr.rel (%p206) target = $region32
        $region31: #{tpu_custom_call.1} parent=27 // pred_region
          %s209 = sand.u32 %s42, 1
          %s210 = scalar_lea.sflag [#allocation3], %s209
          %s211 = sand.u32 %s42, 1
          %s212 = smul.addr %s211, 64
          %s213 = scalar_lea.vmem [#allocation2], %s212
          %s214 = smul.u32 4, %s26
          %216 = vsyncadd %s210, 0
          %s217 = smul.addr %s214, 2
          %s218 = smul.addr %s25, 8
          %s219 = sadd.s32 %s217, %s218
          %s220 = smul.addr %s219, 8
          %s221 = scalar_lea.hbm %s0, %s220
          %s222 = sshll.u32 %s221, 4
          %s223 = int_to_ptr.hbm [resolvable:$true] %s222
          %s224 = sshll.u32 %s213, 4
          %s225 = int_to_ptr.vmem [resolvable:$true] %s224
          %230 = dma.hbm_to_vmem [thread:$0]  %s223, 1024, %s225, %s210, 128, 128, 8
        $region32: #{tpu_custom_call.1} parent=27 // pred_fallthru
          _
      $region28: #{tpu_custom_call.1} parent=5 // pred_fallthru
        _
      %p231 = scmp.le.s32.totalorder 1, %s18
      %p232 = scmp.lt.s32.totalorder %s18, 3
      %p233 = pnand %p231, %p232
      %p234 = pneg %p233
      // Predicated region
      $region33: #{tpu_custom_call.1} parent=5 // pred_check
        _
      $region34: #{tpu_custom_call.1} parent=5 // pred_check_branch
        %236 = sbr.rel (%p233) target = $region36
      $region35: #{tpu_custom_call.1} parent=5 // pred_region
        %s237 = ssub.s32 %s18, 1
        %s238 = sand.u32 %s45, 1
        %s239 = scalar_lea.sflag [#allocation3], %s238
        %s240 = sand.u32 %s45, 1
        %s241 = smul.addr %s240, 64
        %s242 = scalar_lea.vmem [#allocation2], %s241
        // Predicated region
        $region37: #{tpu_custom_call.1} parent=35 // pred_check
          %p243 = pneg %p58
        $region38: #{tpu_custom_call.1} parent=35 // pred_check_branch
          %245 = sbr.rel (%p243) target = $region40
        $region39: #{tpu_custom_call.1} parent=35 // pred_region
          %247 = dma.done %s239, 1024
        $region40: #{tpu_custom_call.1} parent=35 // pred_fallthru
          _
        // Predicated region
        $region41: #{tpu_custom_call.1} parent=35 // pred_check
          %p248 = pneg %p79
        $region42: #{tpu_custom_call.1} parent=35 // pred_check_branch
          %250 = sbr.rel (%p248) target = $region44
        $region43: #{tpu_custom_call.1} parent=35 // pred_region
          %252 = dma.done [#allocation6], 256
        $region44: #{tpu_custom_call.1} parent=35 // pred_fallthru
          _
        // Predicated region
        $region45: #{tpu_custom_call.1} parent=35 // pred_check
          %p253 = pneg %p100
        $region46: #{tpu_custom_call.1} parent=35 // pred_check_branch
          %255 = sbr.rel (%p253) target = $region48
        $region47: #{tpu_custom_call.1} parent=35 // pred_region
          %257 = dma.done [#allocation6], 128
        $region48: #{tpu_custom_call.1} parent=35 // pred_fallthru
          _
        // Predicated region
        $region49: #{tpu_custom_call.1} parent=35 // pred_check
          %p258 = pneg %p121
        $region50: #{tpu_custom_call.1} parent=35 // pred_check_branch
          %260 = sbr.rel (%p258) target = $region52
        $region51: #{tpu_custom_call.1} parent=35 // pred_region
          %262 = dma.done [#allocation9], 128
        $region52: #{tpu_custom_call.1} parent=35 // pred_fallthru
          _
        %s263 = sand.u32 %s45, 1
        %s264 = scalar_lea.sflag [#allocation3], %s263
        %s265 = sand.u32 %s45, 1
        %s266 = smul.addr %s265, 64
        %s267 = scalar_lea.vmem [#allocation2], %s266
        %p268 = pneg %p58
        %p269 = pneg %p55
        %p270 = pneg %p79
        %p271 = pneg %p76
        %p272 = pneg %p100
        %p273 = pneg %p97
        %p274 = pneg %p121
        %p275 = pneg %p118
        %p276 = pneg %p149
        %p277 = pneg %p146
        %s278 = sand.u32 %s136, 1
        %s279 = scalar_lea.sflag [#allocation4], %s278
        %s280 = sand.u32 %s136, 1
        %s281 = smul.addr %s280, 32
        %s282 = scalar_lea.vmem [#allocation10], %s281
        %s283 = smul.u32 4, %s28
        %s284 = smul.u32 4, %s28
        %v285 = vld [vmem:[%s242] sm:$0xff]
        %v286 = vld [vmem:[%s242 + $0x8] sm:$0xff]
        %v287 = vld [vmem:[%s242 + $0x10] sm:$0xff]
        %v288 = vld [vmem:[%s242 + $0x18] sm:$0xff]
        %v289 = vld [vmem:[%s242 + $0x20] sm:$0xff]
        %v290 = vld [vmem:[%s242 + $0x28] sm:$0xff]
        %v291 = vld [vmem:[%s242 + $0x30] sm:$0xff]
        %v292 = vld [vmem:[%s242 + $0x38] sm:$0xff]
        %v293 = vld [vmem:[#allocation5] sm:$0xff]
        %v294 = vld [vmem:[#allocation5 + $0x8] sm:$0xff]
        %vm295 = vcmask 130048
        %v297 = vsel %vm295, %v285, 0
        %v300 = vsel %vm295, %v286, 0
        %v303 = vsel %vm295, %v287, 0
        %v306 = vsel %vm295, %v288, 0
        %v309 = vsel %vm295, %v289, 0
        %v312 = vsel %vm295, %v290, 0
        %v315 = vsel %vm295, %v291, 0
        %v318 = vsel %vm295, %v292, 0
        %320 = vmatpush.msra.mxu0 0.0
        %321 = vmatpush.msra.mxu0 0.0
        %322 = vmatpush.msra.mxu0 0.0
        %323 = vmatpush.msra.mxu0 0.0
        %324 = vmatpush.msra.mxu0 0.0
        %325 = vmatpush.msra.mxu0 0.0
        %326 = vmatpush.msra.mxu0 0.0
        %327 = vmatpush.msra.mxu0 0.0
        %328 = vmatpush.msra.mxu0 0.0
        %329 = vmatpush.msra.mxu0 0.0
        %330 = vmatpush.msra.mxu0 0.0
        %331 = vmatpush.msra.mxu0 0.0
        %332 = vmatpush.msra.mxu0 0.0
        %333 = vmatpush.msra.mxu0 0.0
        %334 = vmatpush.msra.mxu0 %v294
        %335 = vmatpush.msra.mxu0 %v293
        %336 = vmatmul.f32.gmra.mxu0 %v297
        %v337 = vpop.f32.mrf.mxu0
        %v338 = vadd.f32 0.0, %v337
        %339 = vmatmul.f32.gmra.mxu0 %v300
        %v340 = vpop.f32.mrf.mxu0
        %v341 = vadd.f32 0.0, %v340
        %342 = vmatmul.f32.gmra.mxu0 %v303
        %v343 = vpop.f32.mrf.mxu0
        %v344 = vadd.f32 0.0, %v343
        %345 = vmatmul.f32.gmra.mxu0 %v306
        %v346 = vpop.f32.mrf.mxu0
        %v347 = vadd.f32 0.0, %v346
        %348 = vmatmul.f32.gmra.mxu0 %v309
        %v349 = vpop.f32.mrf.mxu0
        %v350 = vadd.f32 0.0, %v349
        %351 = vmatmul.f32.gmra.mxu0 %v312
        %v352 = vpop.f32.mrf.mxu0
        %v353 = vadd.f32 0.0, %v352
        %354 = vmatmul.f32.gmra.mxu0 %v315
        %v355 = vpop.f32.mrf.mxu0
        %v356 = vadd.f32 0.0, %v355
        %357 = vmatmul.f32.gmra.mxu0 %v318
        %v358 = vpop.f32.mrf.mxu0
        %v359 = vadd.f32 0.0, %v358
        %360 = vdwg.mxu0
        %v361 = vld [vmem:[#allocation7] sm:$0xff]
        %v363 = vsel %vm295, %v361, 0
        %365 = vmatpush.msra.mxu0 0.0
        %366 = vmatpush.msra.mxu0 0.0
        %367 = vmatpush.msra.mxu0 0.0
        %368 = vmatpush.msra.mxu0 0.0
        %369 = vmatpush.msra.mxu0 0.0
        %370 = vmatpush.msra.mxu0 0.0
        %371 = vmatpush.msra.mxu0 0.0
        %372 = vmatpush.msra.mxu0 0.0
        %373 = vmatpush.msra.mxu0 0.0
        %374 = vmatpush.msra.mxu0 0.0
        %375 = vmatpush.msra.mxu0 0.0
        %376 = vmatpush.msra.mxu0 0.0
        %377 = vmatpush.msra.mxu0 0.0
        %378 = vmatpush.msra.mxu0 0.0
        %379 = vmatpush.msra.mxu0 %v341
        %380 = vmatpush.msra.mxu0 %v338
        %381 = vmatmul.f32.gmra.mxu0 %v363
        %v382 = vpop.f32.mrf.mxu0
        %v383 = vadd.f32 0.0, %v382
        %384 = vdwg.mxu0
        %385 = vmatpush.msra.mxu0 0.0
        %386 = vmatpush.msra.mxu0 0.0
        %387 = vmatpush.msra.mxu0 0.0
        %388 = vmatpush.msra.mxu0 0.0
        %389 = vmatpush.msra.mxu0 0.0
        %390 = vmatpush.msra.mxu0 0.0
        %391 = vmatpush.msra.mxu0 0.0
        %392 = vmatpush.msra.mxu0 0.0
        %393 = vmatpush.msra.mxu0 0.0
        %394 = vmatpush.msra.mxu0 0.0
        %395 = vmatpush.msra.mxu0 0.0
        %396 = vmatpush.msra.mxu0 0.0
        %397 = vmatpush.msra.mxu0 0.0
        %398 = vmatpush.msra.mxu0 0.0
        %399 = vmatpush.msra.mxu0 %v347
        %400 = vmatpush.msra.mxu0 %v344
        %401 = vmatmul.f32.gmra.mxu0 %v363
        %v402 = vpop.f32.mrf.mxu0
        %v403 = vadd.f32 0.0, %v402
        %404 = vdwg.mxu0
        %405 = vmatpush.msra.mxu0 0.0
        %406 = vmatpush.msra.mxu0 0.0
        %407 = vmatpush.msra.mxu0 0.0
        %408 = vmatpush.msra.mxu0 0.0
        %409 = vmatpush.msra.mxu0 0.0
        %410 = vmatpush.msra.mxu0 0.0
        %411 = vmatpush.msra.mxu0 0.0
        %412 = vmatpush.msra.mxu0 0.0
        %413 = vmatpush.msra.mxu0 0.0
        %414 = vmatpush.msra.mxu0 0.0
        %415 = vmatpush.msra.mxu0 0.0
        %416 = vmatpush.msra.mxu0 0.0
        %417 = vmatpush.msra.mxu0 0.0
        %418 = vmatpush.msra.mxu0 0.0
        %419 = vmatpush.msra.mxu0 %v353
        %420 = vmatpush.msra.mxu0 %v350
        %421 = vmatmul.f32.gmra.mxu0 %v363
        %v422 = vpop.f32.mrf.mxu0
        %v423 = vadd.f32 0.0, %v422
        %424 = vdwg.mxu0
        %425 = vmatpush.msra.mxu0 0.0
        %426 = vmatpush.msra.mxu0 0.0
        %427 = vmatpush.msra.mxu0 0.0
        %428 = vmatpush.msra.mxu0 0.0
        %429 = vmatpush.msra.mxu0 0.0
        %430 = vmatpush.msra.mxu0 0.0
        %431 = vmatpush.msra.mxu0 0.0
        %432 = vmatpush.msra.mxu0 0.0
        %433 = vmatpush.msra.mxu0 0.0
        %434 = vmatpush.msra.mxu0 0.0
        %435 = vmatpush.msra.mxu0 0.0
        %436 = vmatpush.msra.mxu0 0.0
        %437 = vmatpush.msra.mxu0 0.0
        %438 = vmatpush.msra.mxu0 0.0
        %439 = vmatpush.msra.mxu0 %v359
        %440 = vmatpush.msra.mxu0 %v356
        %441 = vmatmul.f32.gmra.mxu0 %v363
        %v442 = vpop.f32.mrf.mxu0
        %v443 = vadd.f32 0.0, %v442
        %444 = vdwg.mxu0
        %v445 = vld [vmem:[#allocation8] sm:$0xff]
        %v446 = vmul.f32 %v445, %v383
        %v447 = vmul.f32 %v445, %v403
        %v448 = vmul.f32 %v445, %v423
        %v449 = vmul.f32 %v445, %v443
        %vm450 = vcmask 64512
        %451 = vst.msk [vmem:[%s282] sm:$0xff] %vm450, %v446
        %452 = vst.msk [vmem:[%s282 + $0x8] sm:$0xff] %vm450, %v447
        %453 = vst.msk [vmem:[%s282 + $0x10] sm:$0xff] %vm450, %v448
        %454 = vst.msk [vmem:[%s282 + $0x18] sm:$0xff] %vm450, %v449
        %s455 = sand.u32 %s136, 1
        %s456 = scalar_lea.sflag [#allocation4], %s455
        %s457 = sand.u32 %s136, 1
        %s458 = smul.addr %s457, 32
        %s459 = scalar_lea.vmem [#allocation10], %s458
        // Predicated region
        $region53: #{tpu_custom_call.1} parent=35 // pred_check
          %p460 = pneg %p146
        $region54: #{tpu_custom_call.1} parent=35 // pred_check_branch
          %462 = sbr.rel (%p460) target = $region56
        $region55: #{tpu_custom_call.1} parent=35 // pred_region
          %s463 = smul.u32 4, %s28
          %465 = vsyncadd %s456, 0
          %s466 = smul.addr %s27, 4
          %s467 = sadd.s32 %s463, %s466
          %s468 = smul.addr %s467, 8
          %s469 = scalar_lea.hbm %s4, %s468
          %s470 = sshll.u32 %s459, 4
          %s471 = int_to_ptr.vmem [resolvable:$true] %s470
          %s472 = sshll.u32 %s469, 4
          %s473 = int_to_ptr.hbm [resolvable:$true] %s472
          %478 = dma.vmem_to_hbm [thread:$0]  %s471, 512, %s473, %s456, 128, 128, 8
        $region56: #{tpu_custom_call.1} parent=35 // pred_fallthru
          _
      $region36: #{tpu_custom_call.1} parent=5 // pred_fallthru
        _
      %p479 = scmp.le.s32.totalorder 2, %s18
      // Predicated region
      $region57: #{tpu_custom_call.1} parent=5 // pred_check
        %p480 = pneg %p479
      $region58: #{tpu_custom_call.1} parent=5 // pred_check_branch
        %482 = sbr.rel (%p480) target = $region60
      $region59: #{tpu_custom_call.1} parent=5 // pred_region
        %s483 = ssub.s32 %s18, 2
        // Predicated region
        $region61: #{tpu_custom_call.1} parent=59 // pred_check
          %p484 = pneg %p152
        $region62: #{tpu_custom_call.1} parent=59 // pred_check_branch
          %486 = sbr.rel (%p484) target = $region64
        $region63: #{tpu_custom_call.1} parent=59 // pred_region
          %s487 = sand.u32 %s137, 1
          %s488 = scalar_lea.sflag [#allocation4], %s487
          %s489 = sand.u32 %s137, 1
          %s490 = smul.addr %s489, 32
          %s491 = scalar_lea.vmem [#allocation10], %s490
          %493 = dma.done %s488, 512
        $region64: #{tpu_custom_call.1} parent=59 // pred_fallthru
          _
      $region60: #{tpu_custom_call.1} parent=5 // pred_fallthru
        _
    $region6: #{tpu_custom_call.1} parent=1 // loop_footer
      %s22 = sadd.s32 1, %s18
    $region7: #{tpu_custom_call.1} parent=1 // loop_footer_branch
      %17 = sbr.rel target = $region3
    $region8: #{tpu_custom_call.1} parent=1 // loop_exit
      _
    %494 = vsyncpa [#allocation3], 1
    %s495 = scalar_lea.sflag [#allocation3], 1
    %496 = vsyncpa %s495, 1
    %497 = vsyncpa [#allocation6], 1
    %498 = vsyncpa [#allocation9], 1
    %499 = vsyncpa [#allocation4], 1
    %s500 = scalar_lea.sflag [#allocation4], 1
    %501 = vsyncpa %s500, 1

</llo_original>
